<compile_context>
chip_gen: v5e
topology: v5e:2x2
jax: 0.10.0
libtpu: 0.0.40
codegen_flags: <defaults>
</compile_context>

<pallas_src>
import functools

import numpy as np
import jax
import jax.numpy as jnp
from jax.experimental import pallas as pl
from jax.experimental.pallas import tpu as pltpu


def _round_up(x, m):
    return (x + m - 1) // m * m


def _pick_tile(total, cands=(512, 256, 128)):
    for t in cands:
        if total % t == 0:
            return min(t, total)
    return total


# -----------------------------------------------------------------------------
# Kernel 1: conv3x3 (single K=9C dot) + ReLU + GAP (MXU) + BN-neck finalize
# -----------------------------------------------------------------------------
def _conv_pool_kernel(patch_ref, w_ref, pool_ref, bn_ref, pooled_ref, normed_ref):
    c = pl.program_id(0)

    @pl.when(c == 0)
    def _init():
        pooled_ref[...] = jnp.zeros_like(pooled_ref)

    # conv3x3 as ONE MXU dot over the merged taps*channels contraction.
    feat = jnp.dot(patch_ref[...], w_ref[...],
                   preferred_element_type=jnp.float32)          # [TQ, Ep] f32
    feat = jnp.maximum(feat, 0.0)                               # fused ReLU
    # Global-average-pool on the MXU: block-diagonal 1/(H*W) pool matrix,
    # f32 x f32 dot so the pooled embeddings keep full precision.
    pooled_ref[...] += jnp.dot(pool_ref[...], feat,
                               preferred_element_type=jnp.float32)  # [Bp, Ep]

    @pl.when(c == pl.num_programs(0) - 1)
    def _finalize():
        scale = bn_ref[0:1, :]
        shift = bn_ref[1:2, :]
        normed_ref[...] = (pooled_ref[...] * scale + shift).astype(normed_ref.dtype)


# -----------------------------------------------------------------------------
# Kernel 2: batched softmax-linear GEMM, tiled over the class dimension
# -----------------------------------------------------------------------------
def _classifier_kernel(normed_ref, w_ref, logit_ref):
    logit_ref[...] = jnp.dot(normed_ref[...], w_ref[...],
                             preferred_element_type=jnp.float32)


# -----------------------------------------------------------------------------
# Fused forward
# -----------------------------------------------------------------------------
@functools.partial(jax.jit, static_argnames=("embed_dim", "soft_dim"))
def reid_forward(x_nchw, w_mat, bn_fold, soft_w_p, *, embed_dim, soft_dim):
    """x_nchw: [B, C, H, W] f32.  Prepared params (see prepare_params):
         w_mat:    [9*C, Ep]  bf16  (tap-major conv weight, E padded to 128)
         bn_fold:  [2, Ep]    f32   (row0 = gamma*rsqrt(var+eps), row1 = beta - mean*scale)
         soft_w_p: [Ep, Sp]   bf16  (softmax weight, pre-transposed + padded)
       Returns (logits [B, S], pooled pre-BN embeddings [B, E])."""
    B, C, H, W = x_nchw.shape
    Kc, Ep = w_mat.shape                 # Kc = 9*C
    Sp = soft_w_p.shape[1]

    # --- input prep: NCHW -> padded NHWC -> im2col [B*H*W, 9C] bf16 (lane-dense) ---
    x = jnp.transpose(x_nchw, (0, 2, 3, 1))                      # [B, H, W, C]
    xp = jnp.pad(x, ((0, 0), (1, 1), (1, 1), (0, 0)))            # [B, H+2, W+2, C]
    taps = [xp[:, kh:kh + H, kw:kw + W, :] for kh in range(3) for kw in range(3)]
    patches = jnp.concatenate(taps, axis=-1).reshape(B * H * W, Kc)  # tap-major cols
    M = B * H * W

    # Row-chunk size: bound the [TQ, Ep] f32 conv intermediate to ~2 MiB of VMEM
    # (keeps v5e's 16 MiB scoped default comfortable at Ep up to 2048).
    TQ = min(256, max(8, ((2 << 20) // (Ep * 4)) // 8 * 8))
    Mp = _round_up(M, TQ)
    n_chunks = Mp // TQ
    Bp = _round_up(B, 8)

    patches = jnp.pad(patches, ((0, Mp - M), (0, 0))).astype(jnp.bfloat16)

    # Block-diagonal pooling matrix: pool[b, m] = 1/(H*W) iff row m belongs to image b.
    m_idx = jnp.arange(Mp)
    b_idx = jnp.arange(Bp)
    pool_mat = jnp.where(
        (b_idx[:, None] == (m_idx // (H * W))[None, :]) & (m_idx < M)[None, :],
        1.0 / (H * W), 0.0).astype(jnp.float32)                  # [Bp, Mp]

    # Conservative VMEM estimate; only raise the scoped limit if we'd exceed it.
    vmem_need = (2 * TQ * Kc * 2              # double-buffered bf16 im2col rows
                 + 2 * Bp * TQ * 4            # double-buffered f32 pool slabs
                 + Kc * Ep * 2 + 2 * Ep * 4   # resident conv weight + BN fold
                 + Bp * Ep * (4 + 2)          # resident pooled / normed outputs
                 + 2 * TQ * Ep * 4)           # conv intermediate + dot temporaries
    conv_params = dict(dimension_semantics=("arbitrary",))       # chunk axis = reduction
    if vmem_need > (12 << 20):
        conv_params["vmem_limit_bytes"] = int(vmem_need * 3 // 2)

    pooled_p, normed_p = pl.pallas_call(
        _conv_pool_kernel,
        out_shape=(jax.ShapeDtypeStruct((Bp, Ep), jnp.float32),   # pre-BN pooled
                   jax.ShapeDtypeStruct((Bp, Ep), jnp.bfloat16)), # BN'd embeddings
        grid=(n_chunks,),
        in_specs=[
            pl.BlockSpec((TQ, Kc), lambda c: (c, 0)),    # im2col rows (streamed)
            pl.BlockSpec((Kc, Ep), lambda c: (0, 0)),    # conv weight (resident)
            pl.BlockSpec((Bp, TQ), lambda c: (0, c)),    # pool-matrix slab
            pl.BlockSpec((2, Ep), lambda c: (0, 0)),     # folded BN scale/shift
        ],
        out_specs=(
            pl.BlockSpec((Bp, Ep), lambda c: (0, 0)),    # resident accumulator
            pl.BlockSpec((Bp, Ep), lambda c: (0, 0)),
        ),
        compiler_params=pltpu.CompilerParams(**conv_params),
    )(patches, w_mat, pool_mat, bn_fold)

    # --- classifier: one batched GEMM over the whole batch, tiled over classes ---
    # TODO(synk): for very small B on v7x the conv kernel itself could also split
    # spatial chunks across the two TensorCores with a partial-pool combine.
    TS = _pick_tile(Sp)
    logits_p = pl.pallas_call(
        _classifier_kernel,
        out_shape=jax.ShapeDtypeStruct((Bp, Sp), jnp.float32),
        grid=(Sp // TS,),
        in_specs=[
            pl.BlockSpec((Bp, Ep), lambda s: (0, 0)),    # BN'd embeddings (resident)
            pl.BlockSpec((Ep, TS), lambda s: (0, s)),    # classifier weight tile
        ],
        out_specs=pl.BlockSpec((Bp, TS), lambda s: (0, s)),
        compiler_params=pltpu.CompilerParams(
            dimension_semantics=("parallel",)),          # class tiles -> megacore
    )(normed_p, soft_w_p)

    pooled = pooled_p[:B, :embed_dim]
    logits = logits_p[:B, :soft_dim]
    return logits, pooled


# -----------------------------------------------------------------------------
# Deterministic parameter construction (mirrors ReidModel __init__ inits)
# -----------------------------------------------------------------------------
def make_params(key, C, E, S):
    k_conv, k_soft = jax.random.split(key, 2)
    fan_in = C * 3 * 3
    # weights_init_kaiming: Conv -> kaiming_normal_(mode='fan_in') => std = sqrt(2/fan_in)
    conv_w = jax.random.normal(k_conv, (E, C, 3, 3), jnp.float32) * jnp.sqrt(2.0 / fan_in)
    # BatchNorm feat_norm: weight=1, bias=0, eval-mode running stats
    bn_gamma = jnp.ones((E,), jnp.float32)
    bn_beta = jnp.zeros((E,), jnp.float32)
    bn_mean = jnp.zeros((E,), jnp.float32)
    bn_var = jnp.ones((E,), jnp.float32)
    # weights_init_softmax: Linear -> normal_(std=0.001), no bias
    soft_w = jax.random.normal(k_soft, (S, E), jnp.float32) * 0.001
    return conv_w, bn_gamma, bn_beta, bn_mean, bn_var, soft_w


def prepare_params(conv_w, bn_gamma, bn_beta, bn_mean, bn_var, soft_w):
    """One-time prep hoisted out of the forward: fold BN, reshape/pad/cast weights.

    Padding invariants (coupled -- keep in sync):
      * conv-weight columns E..Ep are ZERO  -> padded pooled lanes stay zero,
      * bn_fold shift lanes E..Ep are ZERO (scale pad value irrelevant, kept 1.0)
                                            -> padded normed lanes stay zero,
      * soft_w_p rows E..Ep and cols S..Sp are ZERO -> padding never leaks into
                                                       real logits.
    """
    E, C, KH, KW = conv_w.shape
    S = soft_w.shape[0]
    Ep = _round_up(E, 128)
    Sp = _round_up(S, 128)
    # conv weight [E,C,3,3] -> tap-major rows [9*C, E] (matches im2col column
    # order: (kh, kw, c)), pad E->Ep, bf16.
    w_mat = conv_w.transpose(2, 3, 1, 0).reshape(KH * KW * C, E)
    w_mat = jnp.pad(w_mat, ((0, 0), (0, Ep - E))).astype(jnp.bfloat16)
    # Fold eval-mode BatchNorm1d into a single scale/shift pair, packed [2, Ep].
    scale = bn_gamma * jax.lax.rsqrt(bn_var + 1e-5)
    shift = bn_beta - bn_mean * scale
    bn_fold = jnp.stack([
        jnp.pad(scale, (0, Ep - E), constant_values=1.0),
        jnp.pad(shift, (0, Ep - E)),
    ]).astype(jnp.float32)
    # softmax linear (bias-free): y = x @ W^T, pre-transposed + padded, bf16
    soft_w_p = jnp.pad(soft_w.T, ((0, Ep - E), (0, Sp - S))).astype(jnp.bfloat16)
    return w_mat, bn_fold, soft_w_p


# -----------------------------------------------------------------------------
# Pure-JAX f32 reference (sanity check only)
# -----------------------------------------------------------------------------
def reference_forward(x, conv_w, bn_gamma, bn_beta, bn_mean, bn_var, soft_w):
    y = jax.lax.conv_general_dilated(
        x, conv_w, window_strides=(1, 1), padding=((1, 1), (1, 1)),
        dimension_numbers=("NCHW", "OIHW", "NCHW"))
    y = jnp.maximum(y, 0.0)
    pooled = jnp.mean(y, axis=(2, 3))
    normed = (pooled - bn_mean) * jax.lax.rsqrt(bn_var + 1e-5) * bn_gamma + bn_beta
    logits = normed @ soft_w.T
    return logits, pooled


if __name__ == "__main__":
    B, C, H, W = 2, 4, 16, 16        # small NCHW input
    E = 32                           # embedding_dimensions
    S = 8                            # soft_dimensions

    key = jax.random.PRNGKey(0)
    k_x, k_p = jax.random.split(key)
    x = jax.random.normal(k_x, (B, C, H, W), jnp.float32)
    raw_params = make_params(k_p, C, E, S)
    prepared = prepare_params(*raw_params)   # one-time parameter prep (outside forward)

    logits, embeddings = reid_forward(x, *prepared, embed_dim=E, soft_dim=S)
    jax.block_until_ready((logits, embeddings))

    assert logits.shape == (B, S) and embeddings.shape == (B, E)

    # Sanity check vs pure-JAX f32 reference (bf16 MXU operands -> loose tolerance).
    ref_logits, ref_pooled = reference_forward(x, *raw_params)
    np.testing.assert_allclose(np.asarray(embeddings), np.asarray(ref_pooled),
                               rtol=5e-2, atol=5e-2)
    np.testing.assert_allclose(np.asarray(logits), np.asarray(ref_logits),
                               rtol=5e-2, atol=5e-2)
    print("KERNEL_OK")
</pallas_src>

<mosaic_0001>
module attributes {stable_mosaic.version = 11 : i64} {
  func.func @_conv_pool_kernel(%arg0: i32, %arg1: memref<256x36xbf16, #tpu.memory_space<vmem>>, %arg2: memref<36x128xbf16, #tpu.memory_space<vmem>>, %arg3: memref<8x256xf32, #tpu.memory_space<vmem>>, %arg4: memref<2x128xf32, #tpu.memory_space<vmem>>, %arg5: memref<8x128xf32, #tpu.memory_space<vmem>>, %arg6: memref<8x128xbf16, #tpu.memory_space<vmem>>) attributes {dimension_semantics = [#tpu.dimension_semantics<arbitrary>], iteration_bounds = array<i64: 2>, scalar_prefetch = 0 : i64, scratch_operands = 0 : i64, tpu.core_type = #tpu.core_type<tc>, window_params = [{transform_indices = @transform_0, window_bounds = array<i64: 256, 36>}, {pipeline_mode = #tpu.pipeline_mode<synchronous>, transform_indices = @transform_1, window_bounds = array<i64: 36, 128>}, {transform_indices = @transform_2, window_bounds = array<i64: 8, 256>}, {pipeline_mode = #tpu.pipeline_mode<synchronous>, transform_indices = @transform_3, window_bounds = array<i64: 2, 128>}, {pipeline_mode = #tpu.pipeline_mode<synchronous>, transform_indices = @transform_4, window_bounds = array<i64: 8, 128>}, {pipeline_mode = #tpu.pipeline_mode<synchronous>, transform_indices = @transform_5, window_bounds = array<i64: 8, 128>}]} {
    %c0_i32 = arith.constant 0 : i32
    %0 = arith.cmpi eq, %arg0, %c0_i32 : i32
    %1 = arith.extui %0 : i1 to i32
    %c0_i32_0 = arith.constant 0 : i32
    %2 = arith.cmpi ne, %1, %c0_i32_0 : i32
    scf.if %2 {
      %cst_13 = arith.constant 0.000000e+00 : f32
      %16 = vector.broadcast %cst_13 : f32 to vector<8x128xf32>
      %c0_14 = arith.constant 0 : index
      %c0_15 = arith.constant 0 : index
      %17 = vector.load %arg5[%c0_14, %c0_15] : memref<8x128xf32, #tpu.memory_space<vmem>>, vector<8x128xf32>
      tpu.vector_store %arg5[%c0_14, %c0_15], %16 {strides = array<i32>} : memref<8x128xf32, #tpu.memory_space<vmem>>, vector<8x128xf32>,
    } else {
    }
    %c0 = arith.constant 0 : index
    %c0_1 = arith.constant 0 : index
    %3 = vector.load %arg1[%c0, %c0_1] : memref<256x36xbf16, #tpu.memory_space<vmem>>, vector<256x36xbf16>
    %c0_2 = arith.constant 0 : index
    %c0_3 = arith.constant 0 : index
    %4 = vector.load %arg2[%c0_2, %c0_3] : memref<36x128xbf16, #tpu.memory_space<vmem>>, vector<36x128xbf16>
    %cst = arith.constant dense<0.000000e+00> : vector<256x128xf32>
    %5 = tpu.matmul %3, %4, %cst {dimension_numbers = #tpu.dot_dimension_numbers<[1], [0], [0], [1], [0, 0, 1, 1], [], []>} : vector<256x36xbf16>, vector<36x128xbf16>, vector<256x128xf32> -> vector<256x128xf32>
    %cst_4 = arith.constant 0.000000e+00 : f32
    %6 = vector.broadcast %cst_4 : f32 to vector<256x128xf32>
    %7 = arith.maximumf %5, %6 : vector<256x128xf32>
    %c0_5 = arith.constant 0 : index
    %c0_6 = arith.constant 0 : index
    %8 = vector.load %arg5[%c0_5, %c0_6] : memref<8x128xf32, #tpu.memory_space<vmem>>, vector<8x128xf32>
    %c0_7 = arith.constant 0 : index
    %c0_8 = arith.constant 0 : index
    %9 = vector.load %arg3[%c0_7, %c0_8] : memref<8x256xf32, #tpu.memory_space<vmem>>, vector<8x256xf32>
    %cst_9 = arith.constant dense<0.000000e+00> : vector<8x128xf32>
    %10 = tpu.matmul %9, %7, %cst_9 {dimension_numbers = #tpu.dot_dimension_numbers<[1], [0], [0], [1], [0, 0, 1, 1], [], []>} : vector<8x256xf32>, vector<256x128xf32>, vector<8x128xf32> -> vector<8x128xf32>
    %11 = arith.addf %8, %10 : vector<8x128xf32>
    %c0_10 = arith.constant 0 : index
    %c0_11 = arith.constant 0 : index
    %12 = vector.load %arg5[%c0_10, %c0_11] : memref<8x128xf32, #tpu.memory_space<vmem>>, vector<8x128xf32>
    tpu.vector_store %arg5[%c0_10, %c0_11], %11 {strides = array<i32>} : memref<8x128xf32, #tpu.memory_space<vmem>>, vector<8x128xf32>,
    %c1_i32 = arith.constant 1 : i32
    %13 = arith.cmpi eq, %arg0, %c1_i32 : i32
    %14 = arith.extui %13 : i1 to i32
    %c0_i32_12 = arith.constant 0 : i32
    %15 = arith.cmpi ne, %14, %c0_i32_12 : i32
    scf.if %15 {
      %c0_13 = arith.constant 0 : index
      %c0_14 = arith.constant 0 : index
      %16 = vector.load %arg4[%c0_13, %c0_14] : memref<2x128xf32, #tpu.memory_space<vmem>>, vector<1x128xf32>
      %c1 = arith.constant 1 : index
      %c0_15 = arith.constant 0 : index
      %17 = vector.load %arg4[%c1, %c0_15] : memref<2x128xf32, #tpu.memory_space<vmem>>, vector<1x128xf32>
      %c0_16 = arith.constant 0 : index
      %c0_17 = arith.constant 0 : index
      %18 = vector.load %arg5[%c0_16, %c0_17] : memref<8x128xf32, #tpu.memory_space<vmem>>, vector<8x128xf32>
      %19 = vector.broadcast %16 : vector<1x128xf32> to vector<8x128xf32>
      %20 = arith.mulf %18, %19 : vector<8x128xf32>
      %21 = vector.broadcast %17 : vector<1x128xf32> to vector<8x128xf32>
      %22 = arith.addf %20, %21 : vector<8x128xf32>
      %23 = arith.truncf %22 : vector<8x128xf32> to vector<8x128xbf16>
      %c0_18 = arith.constant 0 : index
      %c0_19 = arith.constant 0 : index
      %24 = vector.load %arg6[%c0_18, %c0_19] : memref<8x128xbf16, #tpu.memory_space<vmem>>, vector<8x128xbf16>
      tpu.vector_store %arg6[%c0_18, %c0_19], %23 {strides = array<i32>} : memref<8x128xbf16, #tpu.memory_space<vmem>>, vector<8x128xbf16>,
    } else {
    }
    return
  }
  func.func @transform_0(%arg0: i32) -> (i32, i32) {
    %c0_i32 = arith.constant 0 : i32
    %c0_i32_0 = arith.constant 0 : i32
    return %arg0, %c0_i32 : i32, i32
  }
  func.func @transform_1(%arg0: i32) -> (i32, i32) {
    %c0_i32 = arith.constant 0 : i32
    %c0_i32_0 = arith.constant 0 : i32
    %c0_i32_1 = arith.constant 0 : i32
    return %c0_i32, %c0_i32_0 : i32, i32
  }
  func.func @transform_2(%arg0: i32) -> (i32, i32) {
    %c0_i32 = arith.constant 0 : i32
    %c0_i32_0 = arith.constant 0 : i32
    return %c0_i32, %arg0 : i32, i32
  }
  func.func @transform_3(%arg0: i32) -> (i32, i32) {
    %c0_i32 = arith.constant 0 : i32
    %c0_i32_0 = arith.constant 0 : i32
    %c0_i32_1 = arith.constant 0 : i32
    return %c0_i32, %c0_i32_0 : i32, i32
  }
  func.func @transform_4(%arg0: i32) -> (i32, i32) {
    %c0_i32 = arith.constant 0 : i32
    %c0_i32_0 = arith.constant 0 : i32
    %c0_i32_1 = arith.constant 0 : i32
    return %c0_i32, %c0_i32_0 : i32, i32
  }
  func.func @transform_5(%arg0: i32) -> (i32, i32) {
    %c0_i32 = arith.constant 0 : i32
    %c0_i32_0 = arith.constant 0 : i32
    %c0_i32_1 = arith.constant 0 : i32
    return %c0_i32, %c0_i32_0 : i32, i32
  }
}

module attributes {stable_mosaic.version = 11 : i64} {
  func.func @_classifier_kernel(%arg0: i32, %arg1: memref<8x128xbf16, #tpu.memory_space<vmem>>, %arg2: memref<128x128xbf16, #tpu.memory_space<vmem>>, %arg3: memref<8x128xf32, #tpu.memory_space<vmem>>) attributes {dimension_semantics = [#tpu.dimension_semantics<parallel>], iteration_bounds = array<i64: 1>, scalar_prefetch = 0 : i64, scratch_operands = 0 : i64, tpu.core_type = #tpu.core_type<tc>, window_params = [{pipeline_mode = #tpu.pipeline_mode<synchronous>, transform_indices = @transform_0, window_bounds = array<i64: 8, 128>}, {transform_indices = @transform_1, window_bounds = array<i64: 128, 128>}, {transform_indices = @transform_2, window_bounds = array<i64: 8, 128>}]} {
    %c0 = arith.constant 0 : index
    %c0_0 = arith.constant 0 : index
    %0 = vector.load %arg1[%c0, %c0_0] : memref<8x128xbf16, #tpu.memory_space<vmem>>, vector<8x128xbf16>
    %c0_1 = arith.constant 0 : index
    %c0_2 = arith.constant 0 : index
    %1 = vector.load %arg2[%c0_1, %c0_2] : memref<128x128xbf16, #tpu.memory_space<vmem>>, vector<128x128xbf16>
    %cst = arith.constant dense<0.000000e+00> : vector<8x128xf32>
    %2 = tpu.matmul %0, %1, %cst {dimension_numbers = #tpu.dot_dimension_numbers<[1], [0], [0], [1], [0, 0, 1, 1], [], []>} : vector<8x128xbf16>, vector<128x128xbf16>, vector<8x128xf32> -> vector<8x128xf32>
    %c0_3 = arith.constant 0 : index
    %c0_4 = arith.constant 0 : index
    %3 = vector.load %arg3[%c0_3, %c0_4] : memref<8x128xf32, #tpu.memory_space<vmem>>, vector<8x128xf32>
    tpu.vector_store %arg3[%c0_3, %c0_4], %2 {strides = array<i32>} : memref<8x128xf32, #tpu.memory_space<vmem>>, vector<8x128xf32>,
    return
  }
  func.func @transform_0(%arg0: i32) -> (i32, i32) {
    %c0_i32 = arith.constant 0 : i32
    %c0_i32_0 = arith.constant 0 : i32
    %c0_i32_1 = arith.constant 0 : i32
    return %c0_i32, %c0_i32_0 : i32, i32
  }
  func.func @transform_1(%arg0: i32) -> (i32, i32) {
    %c0_i32 = arith.constant 0 : i32
    %c0_i32_0 = arith.constant 0 : i32
    return %c0_i32, %arg0 : i32, i32
  }
  func.func @transform_2(%arg0: i32) -> (i32, i32) {
    %c0_i32 = arith.constant 0 : i32
    %c0_i32_0 = arith.constant 0 : i32
    return %c0_i32, %arg0 : i32, i32
  }
}

</mosaic_0001>

<llo_original>
// kernel: reid_forward.3
$region0: #{reid_forward.3}
  #allocation0 [shape = 'u32[]', space=smem, size = 0x4, offset = 0x4, fixed_abs, tag = 'smem constant byte address 0x4 - core index']
  #allocation1 [shape = 'u32[72,128]{1,0:T(1,128)}', space=vmem, size = 0x9000, scoped, tag = 'internal scratch']
  %s0 = inlined_call_operand.vmem [shape: bf16[8,128], index: 0, kind: input, shape index: {}]
  %s1 = inlined_call_operand.vmem [shape: bf16[128,128], index: 1, kind: input, shape index: {}]
  %s2 = inlined_call_operand.vmem [shape: f32[8,128], index: 2, kind: output, shape index: {}]
  %s3 = sld [smem:[#allocation0]]
  $region18: #{reid_forward.3} parent=0
    _
  %s5 = ssub.s32 1, %s3
  %s6 = scalar_select 0, %s5, %s3
  // Predicated region
  $region2: #{reid_forward.3} parent=0 // pred_check
    _
  $region3: #{reid_forward.3} parent=0 // pred_check_branch
    %8 = sbr.rel (0) target = $region5
  $region4: #{reid_forward.3} parent=0 // pred_region
    _
  $region5: #{reid_forward.3} parent=0 // pred_fallthru
    _
  // Predicated region
  $region6: #{reid_forward.3} parent=0 // pred_check
    _
  $region7: #{reid_forward.3} parent=0 // pred_check_branch
    %10 = sbr.rel (0) target = $region9
  $region8: #{reid_forward.3} parent=0 // pred_region
    _
  $region9: #{reid_forward.3} parent=0 // pred_fallthru
    _
  %v11 = vld [vmem:[%s0] sm:$0xf]
  %v12 = vld [vmem:[%s1] sm:$0xf]
  %v13 = vld [vmem:[%s1 + $0x4] sm:$0xf]
  %v14 = vld [vmem:[%s1 + $0x8] sm:$0xf]
  %v15 = vld [vmem:[%s1 + $0xc] sm:$0xf]
  %v16 = vld [vmem:[%s1 + $0x10] sm:$0xf]
  %v17 = vld [vmem:[%s1 + $0x14] sm:$0xf]
  %v18 = vld [vmem:[%s1 + $0x18] sm:$0xf]
  %v19 = vld [vmem:[%s1 + $0x1c] sm:$0xf]
  %v20 = vld [vmem:[%s1 + $0x20] sm:$0xf]
  %v21 = vld [vmem:[%s1 + $0x24] sm:$0xf]
  %v22 = vld [vmem:[%s1 + $0x28] sm:$0xf]
  %v23 = vld [vmem:[%s1 + $0x2c] sm:$0xf]
  %v24 = vld [vmem:[%s1 + $0x30] sm:$0xf]
  %v25 = vld [vmem:[%s1 + $0x34] sm:$0xf]
  %v26 = vld [vmem:[%s1 + $0x38] sm:$0xf]
  %v27 = vld [vmem:[%s1 + $0x3c] sm:$0xf]
  %v44 = vunpack.c.l.b16 %v12
  %v45 = vunpack.c.l.b16 %v13
  %v46 = vunpack.c.l.b16 %v14
  %v47 = vunpack.c.l.b16 %v15
  %v48 = vunpack.c.l.b16 %v16
  %v49 = vunpack.c.l.b16 %v17
  %v50 = vunpack.c.l.b16 %v18
  %v51 = vunpack.c.l.b16 %v19
  %v52 = vunpack.c.l.b16 %v20
  %v53 = vunpack.c.l.b16 %v21
  %v54 = vunpack.c.l.b16 %v22
  %v55 = vunpack.c.l.b16 %v23
  %v56 = vunpack.c.l.b16 %v24
  %v57 = vunpack.c.l.b16 %v25
  %v58 = vunpack.c.l.b16 %v26
  %v59 = vunpack.c.l.b16 %v27
  %v60 = vpack.c.b16 %v45, %v44
  %v61 = vpack.c.b16 %v47, %v46
  %v62 = vpack.c.b16 %v49, %v48
  %v63 = vpack.c.b16 %v51, %v50
  %v64 = vpack.c.b16 %v53, %v52
  %v65 = vpack.c.b16 %v55, %v54
  %v66 = vpack.c.b16 %v57, %v56
  %v67 = vpack.c.b16 %v59, %v58
  %76 = vmatpush.bf16.msra.mxu0 %v67
  %77 = vmatpush.bf16.msra.mxu0 %v66
  %78 = vmatpush.bf16.msra.mxu0 %v65
  %79 = vmatpush.bf16.msra.mxu0 %v64
  %80 = vmatpush.bf16.msra.mxu0 %v63
  %81 = vmatpush.bf16.msra.mxu0 %v62
  %82 = vmatpush.bf16.msra.mxu0 %v61
  %83 = vmatpush.bf16.msra.mxu0 %v60
  %84 = vmatmul.bf16.gmra.mxu0 %v11
  %v85 = vpop.f32.mrf.mxu0
  %v86 = vadd.f32 0.0, %v85
  %v87 = vpop.f32.mrf.mxu0
  %88 = vdwg.mxu0
  %89 = vst [vmem:[%s2] sm:$0xff] %v86
  // Predicated region
  $region10: #{reid_forward.3} parent=0 // pred_check
    _
  $region11: #{reid_forward.3} parent=0 // pred_check_branch
    %91 = sbr.rel (0) target = $region13
  $region12: #{reid_forward.3} parent=0 // pred_region
    _
  $region13: #{reid_forward.3} parent=0 // pred_fallthru
    _
  // Predicated region
  $region14: #{reid_forward.3} parent=0 // pred_check
    _
  $region15: #{reid_forward.3} parent=0 // pred_check_branch
    %93 = sbr.rel (0) target = $region17
  $region16: #{reid_forward.3} parent=0 // pred_region
    _
  $region17: #{reid_forward.3} parent=0 // pred_fallthru
    _

// kernel: reid_forward.2
$region0: #{reid_forward.2}
  #allocation0 [shape = 'u32[]', space=smem, size = 0x4, offset = 0x4, fixed_abs, tag = 'smem constant byte address 0x4 - core index']
  #allocation1 [shape = 'u32[72,128]{1,0:T(1,128)}', space=vmem, size = 0x9000, scoped, tag = 'internal scratch']
  %s0 = inlined_call_operand.vmem [shape: bf16[512,36], index: 0, kind: input, shape index: {}]
  %s1 = inlined_call_operand.vmem [shape: bf16[36,128], index: 1, kind: input, shape index: {}]
  %s2 = inlined_call_operand.vmem [shape: f32[8,512], index: 2, kind: input, shape index: {}]
  %s3 = inlined_call_operand.vmem [shape: f32[2,128], index: 3, kind: input, shape index: {}]
  %s4 = inlined_call_operand.vmem [shape: f32[8,128], index: 4, kind: output, shape index: {0}]
  %s5 = inlined_call_operand.vmem [shape: bf16[8,128], index: 5, kind: output, shape index: {1}]
  %6 = xla_tuple %s4, %s5
  %s7 = sld [smem:[#allocation0]]
  $region65: #{reid_forward.2} parent=0
    _
  %s9 = ssub.s32 1, %s7
  %s10 = scalar_select 0, %s9, %s7
  loop: start=0, step=1, limit=4
  $region2: #{reid_forward.2} parent=0 // loop_pre_header
    _
  $region3: #{reid_forward.2} parent=0 // loop_header
    %s12 = sphi 0, %s16
    %p13 = scmp.ge.s32.totalorder %s12, 4
    %s22 = sphi 0, %s24
    %s25 = sphi 0, %s22
    %s26 = sphi 0, %s25
    %s42 = sphi 0, %s26
    %s46 = sphi 0, %s46
    %s48 = sphi 0, %s46
    %s49 = sphi 0, %s48
    %s63 = sphi 0, %s49
    %s69 = sphi 0, %s71
    %s72 = sphi 0, %s69
    %s73 = sphi 0, %s72
    %s89 = sphi 0, %s73
    %s93 = sphi 0, %s93
    %s95 = sphi 0, %s93
    %s96 = sphi 0, %s95
    %s110 = sphi 0, %s96
    %s114 = sphi 0, %s114
    %s116 = sphi 0, %s114
    %s117 = sphi 0, %s116
    %s131 = sphi 0, %s117
    %s135 = sphi 0, %s135
    %s137 = sphi 0, %s135
    %s138 = sphi 0, %s137
    %s152 = sphi 0, %s138
  $region4: #{reid_forward.2} parent=0 // loop_header_branch
    %15 = sbr.rel (%p13) target = $region8
  $region5: #{reid_forward.2} parent=0 // loop_body
    %s17 = ssub.s32 %s12, 1
    %s18 = ssub.s32 %s12, 2
    %s19 = sadd.s32 %s12, 1
    %s20 = ssub.s32 %s12, %s19
    %p21 = scmp.eq.s32.totalorder %s20, 0
    %s23 = sadd.s32 %s22, 1
    %s24 = scalar_select %p21, %s22, %s23
    %p27 = pneg %p21
    %p28 = scmp.eq.s32.totalorder %s12, 1
    %p29 = por %p27, %p28
    %p30 = scmp.ne.s32.totalorder %s22, %s25
    %p31 = scmp.eq.s32.totalorder %s12, 0
    %p32 = por %p30, %p31
    %p33 = scmp.ne.s32.totalorder %s22, %s25
    %p34 = scmp.eq.s32.totalorder %s17, 1
    %p35 = por %p33, %p34
    %p36 = scmp.ne.s32.totalorder %s25, %s26
    %p37 = scmp.eq.s32.totalorder %s17, 0
    %p38 = por %p36, %p37
    %p39 = scmp.ne.s32.totalorder %s25, %s26
    %p40 = scmp.eq.s32.totalorder %s18, 1
    %p41 = por %p39, %p40
    %p43 = scmp.ne.s32.totalorder %s26, %s42
    %p44 = scmp.eq.s32.totalorder %s18, 0
    %p45 = por %p43, %p44
    %s47 = sadd.s32 %s46, 1
    %p50 = scmp.eq.s32.totalorder %s12, 1
    %p51 = scmp.ne.s32.totalorder %s46, %s48
    %p52 = scmp.eq.s32.totalorder %s12, 0
    %p53 = por %p51, %p52
    %p54 = scmp.ne.s32.totalorder %s46, %s48
    %p55 = scmp.eq.s32.totalorder %s17, 1
    %p56 = por %p54, %p55
    %p57 = scmp.ne.s32.totalorder %s48, %s49
    %p58 = scmp.eq.s32.totalorder %s17, 0
    %p59 = por %p57, %p58
    %p60 = scmp.ne.s32.totalorder %s48, %s49
    %p61 = scmp.eq.s32.totalorder %s18, 1
    %p62 = por %p60, %p61
    %p64 = scmp.ne.s32.totalorder %s49, %s63
    %p65 = scmp.eq.s32.totalorder %s18, 0
    %p66 = por %p64, %p65
    %s67 = ssub.s32 %s12, %s19
    %p68 = scmp.eq.s32.totalorder %s67, 0
    %s70 = sadd.s32 %s69, 1
    %s71 = scalar_select %p68, %s69, %s70
    %p74 = pneg %p68
    %p75 = scmp.eq.s32.totalorder %s12, 1
    %p76 = por %p74, %p75
    %p77 = scmp.ne.s32.totalorder %s69, %s72
    %p78 = scmp.eq.s32.totalorder %s12, 0
    %p79 = por %p77, %p78
    %p80 = scmp.ne.s32.totalorder %s69, %s72
    %p81 = scmp.eq.s32.totalorder %s17, 1
    %p82 = por %p80, %p81
    %p83 = scmp.ne.s32.totalorder %s72, %s73
    %p84 = scmp.eq.s32.totalorder %s17, 0
    %p85 = por %p83, %p84
    %p86 = scmp.ne.s32.totalorder %s72, %s73
    %p87 = scmp.eq.s32.totalorder %s18, 1
    %p88 = por %p86, %p87
    %p90 = scmp.ne.s32.totalorder %s73, %s89
    %p91 = scmp.eq.s32.totalorder %s18, 0
    %p92 = por %p90, %p91
    %s94 = sadd.s32 %s93, 1
    %p97 = scmp.eq.s32.totalorder %s12, 1
    %p98 = scmp.ne.s32.totalorder %s93, %s95
    %p99 = scmp.eq.s32.totalorder %s12, 0
    %p100 = por %p98, %p99
    %p101 = scmp.ne.s32.totalorder %s93, %s95
    %p102 = scmp.eq.s32.totalorder %s17, 1
    %p103 = por %p101, %p102
    %p104 = scmp.ne.s32.totalorder %s95, %s96
    %p105 = scmp.eq.s32.totalorder %s17, 0
    %p106 = por %p104, %p105
    %p107 = scmp.ne.s32.totalorder %s95, %s96
    %p108 = scmp.eq.s32.totalorder %s18, 1
    %p109 = por %p107, %p108
    %p111 = scmp.ne.s32.totalorder %s96, %s110
    %p112 = scmp.eq.s32.totalorder %s18, 0
    %p113 = por %p111, %p112
    %s115 = sadd.s32 %s114, 1
    %p118 = scmp.eq.s32.totalorder %s12, 1
    %p119 = scmp.ne.s32.totalorder %s114, %s116
    %p120 = scmp.eq.s32.totalorder %s12, 0
    %p121 = por %p119, %p120
    %p122 = scmp.ne.s32.totalorder %s114, %s116
    %p123 = scmp.eq.s32.totalorder %s17, 1
    %p124 = por %p122, %p123
    %p125 = scmp.ne.s32.totalorder %s116, %s117
    %p126 = scmp.eq.s32.totalorder %s17, 0
    %p127 = por %p125, %p126
    %p128 = scmp.ne.s32.totalorder %s116, %s117
    %p129 = scmp.eq.s32.totalorder %s18, 1
    %p130 = por %p128, %p129
    %p132 = scmp.ne.s32.totalorder %s117, %s131
    %p133 = scmp.eq.s32.totalorder %s18, 0
    %p134 = por %p132, %p133
    %s136 = sadd.s32 %s135, 1
    %p139 = scmp.eq.s32.totalorder %s12, 1
    %p140 = scmp.ne.s32.totalorder %s135, %s137
    %p141 = scmp.eq.s32.totalorder %s12, 0
    %p142 = por %p140, %p141
    %p143 = scmp.ne.s32.totalorder %s135, %s137
    %p144 = scmp.eq.s32.totalorder %s17, 1
    %p145 = por %p143, %p144
    %p146 = scmp.ne.s32.totalorder %s137, %s138
    %p147 = scmp.eq.s32.totalorder %s17, 0
    %p148 = por %p146, %p147
    %p149 = scmp.ne.s32.totalorder %s137, %s138
    %p150 = scmp.eq.s32.totalorder %s18, 1
    %p151 = por %p149, %p150
    %p153 = scmp.ne.s32.totalorder %s138, %s152
    %p154 = scmp.eq.s32.totalorder %s18, 0
    %p155 = por %p153, %p154
    %p156 = scmp.le.s32.totalorder 1, %s12
    %p157 = scmp.lt.s32.totalorder %s12, 3
    %p158 = pnand %p156, %p157
    %p159 = pneg %p158
    // Predicated region
    $region9: #{reid_forward.2} parent=5 // pred_check
      _
    $region10: #{reid_forward.2} parent=5 // pred_check_branch
      %161 = sbr.rel (%p158) target = $region12
    $region11: #{reid_forward.2} parent=5 // pred_region
      %s162 = ssub.s32 %s12, 1
      // Predicated region
      $region13: #{reid_forward.2} parent=11 // pred_check
        %p163 = pneg %p59
      $region14: #{reid_forward.2} parent=11 // pred_check_branch
        %165 = sbr.rel (%p163) target = $region16
      $region15: #{reid_forward.2} parent=11 // pred_region
        _
      $region16: #{reid_forward.2} parent=11 // pred_fallthru
        _
      // Predicated region
      $region17: #{reid_forward.2} parent=11 // pred_check
        %p166 = pneg %p106
      $region18: #{reid_forward.2} parent=11 // pred_check_branch
        %168 = sbr.rel (%p166) target = $region20
      $region19: #{reid_forward.2} parent=11 // pred_region
        _
      $region20: #{reid_forward.2} parent=11 // pred_fallthru
        _
    $region12: #{reid_forward.2} parent=5 // pred_fallthru
      _
    %p169 = scmp.lt.s32.totalorder %s12, 2
    // Predicated region
    $region21: #{reid_forward.2} parent=5 // pred_check
      %p170 = pneg %p169
    $region22: #{reid_forward.2} parent=5 // pred_check_branch
      %172 = sbr.rel (%p170) target = $region24
    $region23: #{reid_forward.2} parent=5 // pred_region
      // Predicated region
      $region25: #{reid_forward.2} parent=23 // pred_check
        %p173 = pneg %p32
      $region26: #{reid_forward.2} parent=23 // pred_check_branch
        %175 = sbr.rel (%p173) target = $region28
      $region27: #{reid_forward.2} parent=23 // pred_region
        %s176 = smul.u32 32, %s12
        %p177 = scmp.lt.s32.totalorder %s176, 63
        %s178 = scalar_select %p177, %s176, 63
        %s179 = smul.addr %s178, 4
        %s180 = scalar_lea.vmem %s0, %s179
        %s181 = smul.u32 32, %s12
      $region28: #{reid_forward.2} parent=23 // pred_fallthru
        _
      // Predicated region
      $region29: #{reid_forward.2} parent=23 // pred_check
        %p182 = pneg %p79
      $region30: #{reid_forward.2} parent=23 // pred_check_branch
        %184 = sbr.rel (%p182) target = $region32
      $region31: #{reid_forward.2} parent=23 // pred_region
        %s185 = smul.u32 2, %s12
        %p186 = scmp.lt.s32.totalorder %s185, 3
        %s187 = scalar_select %p186, %s185, 3
        %s188 = smul.addr %s187, 8
        %s189 = scalar_lea.vmem %s2, %s188
        %s190 = smul.u32 2, %s12
      $region32: #{reid_forward.2} parent=23 // pred_fallthru
        _
    $region24: #{reid_forward.2} parent=5 // pred_fallthru
      _
    %p191 = scmp.le.s32.totalorder 1, %s12
    %p192 = scmp.lt.s32.totalorder %s12, 3
    %p193 = pnand %p191, %p192
    %p194 = pneg %p193
    // Predicated region
    $region33: #{reid_forward.2} parent=5 // pred_check
      _
    $region34: #{reid_forward.2} parent=5 // pred_check_branch
      %196 = sbr.rel (%p193) target = $region36
    $region35: #{reid_forward.2} parent=5 // pred_region
      %s197 = ssub.s32 %s12, 1
      %s198 = smul.u32 32, %s17
      %p199 = scmp.lt.s32.totalorder %s198, 63
      %s200 = scalar_select %p199, %s198, 63
      %s201 = smul.addr %s200, 4
      %s202 = scalar_lea.vmem %s0, %s201
      %p203 = pneg %p38
      %p204 = pneg %p35
      %p205 = pneg %p59
      %p206 = pneg %p56
      %s207 = smul.u32 2, %s17
      %p208 = scmp.lt.s32.totalorder %s207, 3
      %s209 = scalar_select %p208, %s207, 3
      %s210 = smul.addr %s209, 8
      %s211 = scalar_lea.vmem %s2, %s210
      %p212 = pneg %p85
      %p213 = pneg %p82
      %p214 = pneg %p106
      %p215 = pneg %p103
      %p216 = pneg %p127
      %p217 = pneg %p124
      %p218 = pneg %p148
      %p219 = pneg %p145
      %s220 = smul.u32 32, %s17
      %p221 = scmp.lt.s32.totalorder %s220, 63
      %s222 = scalar_select %p221, %s220, 63
      %s223 = smul.addr %s222, 4
      %s224 = scalar_lea.vmem %s0, %s223
      %s225 = smul.u32 32, %s17
      %s226 = smul.u32 2, %s17
      %p227 = scmp.lt.s32.totalorder %s226, 3
      %s228 = scalar_select %p227, %s226, 3
      %s229 = smul.addr %s228, 8
      %s230 = scalar_lea.vmem %s2, %s229
      %s231 = smul.u32 2, %s17
      %p233 = scmp.eq.s32.totalorder %s17, 0
      // Predicated region
      $region37: #{reid_forward.2} parent=35 // pred_check
        %p234 = pneg %p233
      $region38: #{reid_forward.2} parent=35 // pred_check_branch
        %236 = sbr.rel (%p234) target = $region40
      $region39: #{reid_forward.2} parent=35 // pred_region
        %237 = vst [vmem:[%s4] sm:$0xff] 0.0
      $region40: #{reid_forward.2} parent=35 // pred_fallthru
        _
      %v238 = vld [vmem:[%s224] sm:$0xf]
      %v239 = vld [vmem:[%s224 + $0x4] sm:$0xf]
      %v240 = vld [vmem:[%s224 + $0x8] sm:$0xf]
      %v241 = vld [vmem:[%s224 + $0xc] sm:$0xf]
      %v242 = vld [vmem:[%s224 + $0x10] sm:$0xf]
      %v243 = vld [vmem:[%s224 + $0x14] sm:$0xf]
      %v244 = vld [vmem:[%s224 + $0x18] sm:$0xf]
      %v245 = vld [vmem:[%s224 + $0x1c] sm:$0xf]
      %v246 = vld [vmem:[%s224 + $0x20] sm:$0xf]
      %v247 = vld [vmem:[%s224 + $0x24] sm:$0xf]
      %v248 = vld [vmem:[%s224 + $0x28] sm:$0xf]
      %v249 = vld [vmem:[%s224 + $0x2c] sm:$0xf]
      %v250 = vld [vmem:[%s224 + $0x30] sm:$0xf]
      %v251 = vld [vmem:[%s224 + $0x34] sm:$0xf]
      %v252 = vld [vmem:[%s224 + $0x38] sm:$0xf]
      %v253 = vld [vmem:[%s224 + $0x3c] sm:$0xf]
      %v254 = vld [vmem:[%s224 + $0x40] sm:$0xf]
      %v255 = vld [vmem:[%s224 + $0x44] sm:$0xf]
      %v256 = vld [vmem:[%s224 + $0x48] sm:$0xf]
      %v257 = vld [vmem:[%s224 + $0x4c] sm:$0xf]
      %v258 = vld [vmem:[%s224 + $0x50] sm:$0xf]
      %v259 = vld [vmem:[%s224 + $0x54] sm:$0xf]
      %v260 = vld [vmem:[%s224 + $0x58] sm:$0xf]
      %v261 = vld [vmem:[%s224 + $0x5c] sm:$0xf]
      %v262 = vld [vmem:[%s224 + $0x60] sm:$0xf]
      %v263 = vld [vmem:[%s224 + $0x64] sm:$0xf]
      %v264 = vld [vmem:[%s224 + $0x68] sm:$0xf]
      %v265 = vld [vmem:[%s224 + $0x6c] sm:$0xf]
      %v266 = vld [vmem:[%s224 + $0x70] sm:$0xf]
      %v267 = vld [vmem:[%s224 + $0x74] sm:$0xf]
      %v268 = vld [vmem:[%s224 + $0x78] sm:$0xf]
      %v269 = vld [vmem:[%s224 + $0x7c] sm:$0xf]
      %v270 = vld [vmem:[%s1] sm:$0xf]
      %v271 = vld [vmem:[%s1 + $0x4] sm:$0xf]
      %v272 = vld [vmem:[%s1 + $0x8] sm:$0xf]
      %v273 = vld [vmem:[%s1 + $0xc] sm:$0xf]
      %v274 = vld [vmem:[%s1 + $0x10] sm:$0x3]
      %v307 = vunpack.c.l.b16 %v238
      %v308 = vunpack.c.l.b16 %v239
      %v309 = vunpack.c.l.b16 %v240
      %v310 = vunpack.c.l.b16 %v241
      %v311 = vunpack.c.l.b16 %v242
      %v312 = vunpack.c.l.b16 %v243
      %v313 = vunpack.c.l.b16 %v244
      %v314 = vunpack.c.l.b16 %v245
      %v315 = vunpack.c.l.b16 %v246
      %v316 = vunpack.c.l.b16 %v247
      %v317 = vunpack.c.l.b16 %v248
      %v318 = vunpack.c.l.b16 %v249
      %v319 = vunpack.c.l.b16 %v250
      %v320 = vunpack.c.l.b16 %v251
      %v321 = vunpack.c.l.b16 %v252
      %v322 = vunpack.c.l.b16 %v253
      %v323 = vunpack.c.l.b16 %v254
      %v324 = vunpack.c.l.b16 %v255
      %v325 = vunpack.c.l.b16 %v256
      %v326 = vunpack.c.l.b16 %v257
      %v327 = vunpack.c.l.b16 %v258
      %v328 = vunpack.c.l.b16 %v259
      %v329 = vunpack.c.l.b16 %v260
      %v330 = vunpack.c.l.b16 %v261
      %v331 = vunpack.c.l.b16 %v262
      %v332 = vunpack.c.l.b16 %v263
      %v333 = vunpack.c.l.b16 %v264
      %v334 = vunpack.c.l.b16 %v265
      %v335 = vunpack.c.l.b16 %v266
      %v336 = vunpack.c.l.b16 %v267
      %v337 = vunpack.c.l.b16 %v268
      %v338 = vunpack.c.l.b16 %v269
      %v339 = vpack.c.b16 %v308, %v307
      %v340 = vpack.c.b16 %v310, %v309
      %v341 = vpack.c.b16 %v312, %v311
      %v342 = vpack.c.b16 %v314, %v313
      %v343 = vpack.c.b16 %v316, %v315
      %v344 = vpack.c.b16 %v318, %v317
      %v345 = vpack.c.b16 %v320, %v319
      %v346 = vpack.c.b16 %v322, %v321
      %v347 = vpack.c.b16 %v324, %v323
      %v348 = vpack.c.b16 %v326, %v325
      %v349 = vpack.c.b16 %v328, %v327
      %v350 = vpack.c.b16 %v330, %v329
      %v351 = vpack.c.b16 %v332, %v331
      %v352 = vpack.c.b16 %v334, %v333
      %v353 = vpack.c.b16 %v336, %v335
      %v354 = vpack.c.b16 %v338, %v337
      %v360 = vunpack.c.l.b16 %v270
      %v361 = vunpack.c.l.b16 %v271
      %v362 = vunpack.c.l.b16 %v272
      %v363 = vunpack.c.l.b16 %v273
      %v364 = vunpack.c.l.b16 %v274
      %v365 = vpack.c.b16 %v361, %v360
      %v366 = vpack.c.b16 %v363, %v362
      %v367 = vpack.c.b16 %v364, %v364
      %vm370 = vcmask 293888
      %v372 = vsel %vm370, %v339, 0
      %v375 = vsel %vm370, %v340, 0
      %v378 = vsel %vm370, %v341, 0
      %v381 = vsel %vm370, %v342, 0
      %v384 = vsel %vm370, %v343, 0
      %v387 = vsel %vm370, %v344, 0
      %v390 = vsel %vm370, %v345, 0
      %v393 = vsel %vm370, %v346, 0
      %v396 = vsel %vm370, %v347, 0
      %v399 = vsel %vm370, %v348, 0
      %v402 = vsel %vm370, %v349, 0
      %v405 = vsel %vm370, %v350, 0
      %v408 = vsel %vm370, %v351, 0
      %v411 = vsel %vm370, %v352, 0
      %v414 = vsel %vm370, %v353, 0
      %v417 = vsel %vm370, %v354, 0
      %vm419 = vcmask 1041408
      %v421 = vsel %vm419, %v367, 0
      %423 = vmatpush.bf16.msra.mxu0 0
      %424 = vmatpush.bf16.msra.mxu0 0
      %425 = vmatpush.bf16.msra.mxu0 0
      %426 = vmatpush.bf16.msra.mxu0 0
      %427 = vmatpush.bf16.msra.mxu0 0
      %428 = vmatpush.bf16.msra.mxu0 %v421
      %429 = vmatpush.bf16.msra.mxu0 %v366
      %430 = vmatpush.bf16.msra.mxu0 %v365
      %431 = vmatmul.bf16.gmra.mxu0 %v372
      %v432 = vpop.f32.mrf.mxu0
      %v433 = vadd.f32 0.0, %v432
      %v434 = vpop.f32.mrf.mxu0
      %v435 = vadd.f32 0.0, %v434
      %436 = vmatmul.bf16.gmra.mxu0 %v375
      %v437 = vpop.f32.mrf.mxu0
      %v438 = vadd.f32 0.0, %v437
      %v439 = vpop.f32.mrf.mxu0
      %v440 = vadd.f32 0.0, %v439
      %441 = vmatmul.bf16.gmra.mxu0 %v378
      %v442 = vpop.f32.mrf.mxu0
      %v443 = vadd.f32 0.0, %v442
      %v444 = vpop.f32.mrf.mxu0
      %v445 = vadd.f32 0.0, %v444
      %446 = vmatmul.bf16.gmra.mxu0 %v381
      %v447 = vpop.f32.mrf.mxu0
      %v448 = vadd.f32 0.0, %v447
      %v449 = vpop.f32.mrf.mxu0
      %v450 = vadd.f32 0.0, %v449
      %451 = vmatmul.bf16.gmra.mxu0 %v384
      %v452 = vpop.f32.mrf.mxu0
      %v453 = vadd.f32 0.0, %v452
      %v454 = vpop.f32.mrf.mxu0
      %v455 = vadd.f32 0.0, %v454
      %456 = vmatmul.bf16.gmra.mxu0 %v387
      %v457 = vpop.f32.mrf.mxu0
      %v458 = vadd.f32 0.0, %v457
      %v459 = vpop.f32.mrf.mxu0
      %v460 = vadd.f32 0.0, %v459
      %461 = vmatmul.bf16.gmra.mxu0 %v390
      %v462 = vpop.f32.mrf.mxu0
      %v463 = vadd.f32 0.0, %v462
      %v464 = vpop.f32.mrf.mxu0
      %v465 = vadd.f32 0.0, %v464
      %466 = vmatmul.bf16.gmra.mxu0 %v393
      %v467 = vpop.f32.mrf.mxu0
      %v468 = vadd.f32 0.0, %v467
      %v469 = vpop.f32.mrf.mxu0
      %v470 = vadd.f32 0.0, %v469
      %471 = vmatmul.bf16.gmra.mxu0 %v396
      %v472 = vpop.f32.mrf.mxu0
      %v473 = vadd.f32 0.0, %v472
      %v474 = vpop.f32.mrf.mxu0
      %v475 = vadd.f32 0.0, %v474
      %476 = vmatmul.bf16.gmra.mxu0 %v399
      %v477 = vpop.f32.mrf.mxu0
      %v478 = vadd.f32 0.0, %v477
      %v479 = vpop.f32.mrf.mxu0
      %v480 = vadd.f32 0.0, %v479
      %481 = vmatmul.bf16.gmra.mxu0 %v402
      %v482 = vpop.f32.mrf.mxu0
      %v483 = vadd.f32 0.0, %v482
      %v484 = vpop.f32.mrf.mxu0
      %v485 = vadd.f32 0.0, %v484
      %486 = vmatmul.bf16.gmra.mxu0 %v405
      %v487 = vpop.f32.mrf.mxu0
      %v488 = vadd.f32 0.0, %v487
      %v489 = vpop.f32.mrf.mxu0
      %v490 = vadd.f32 0.0, %v489
      %491 = vmatmul.bf16.gmra.mxu0 %v408
      %v492 = vpop.f32.mrf.mxu0
      %v493 = vadd.f32 0.0, %v492
      %v494 = vpop.f32.mrf.mxu0
      %v495 = vadd.f32 0.0, %v494
      %496 = vmatmul.bf16.gmra.mxu0 %v411
      %v497 = vpop.f32.mrf.mxu0
      %v498 = vadd.f32 0.0, %v497
      %v499 = vpop.f32.mrf.mxu0
      %v500 = vadd.f32 0.0, %v499
      %501 = vmatmul.bf16.gmra.mxu0 %v414
      %v502 = vpop.f32.mrf.mxu0
      %v503 = vadd.f32 0.0, %v502
      %v504 = vpop.f32.mrf.mxu0
      %v505 = vadd.f32 0.0, %v504
      %506 = vmatmul.bf16.gmra.mxu0 %v417
      %v507 = vpop.f32.mrf.mxu0
      %v508 = vadd.f32 0.0, %v507
      %v509 = vpop.f32.mrf.mxu0
      %v510 = vadd.f32 0.0, %v509
      %511 = vdwg.mxu0
      %v512 = vmax.f32 %v433, 0.0
      %v513 = vmax.f32 %v435, 0.0
      %v514 = vmax.f32 %v438, 0.0
      %v515 = vmax.f32 %v440, 0.0
      %v516 = vmax.f32 %v443, 0.0
      %v517 = vmax.f32 %v445, 0.0
      %v518 = vmax.f32 %v448, 0.0
      %v519 = vmax.f32 %v450, 0.0
      %v520 = vmax.f32 %v453, 0.0
      %v521 = vmax.f32 %v455, 0.0
      %v522 = vmax.f32 %v458, 0.0
      %v523 = vmax.f32 %v460, 0.0
      %v524 = vmax.f32 %v463, 0.0
      %v525 = vmax.f32 %v465, 0.0
      %v526 = vmax.f32 %v468, 0.0
      %v527 = vmax.f32 %v470, 0.0
      %v528 = vmax.f32 %v473, 0.0
      %v529 = vmax.f32 %v475, 0.0
      %v530 = vmax.f32 %v478, 0.0
      %v531 = vmax.f32 %v480, 0.0
      %v532 = vmax.f32 %v483, 0.0
      %v533 = vmax.f32 %v485, 0.0
      %v534 = vmax.f32 %v488, 0.0
      %v535 = vmax.f32 %v490, 0.0
      %v536 = vmax.f32 %v493, 0.0
      %v537 = vmax.f32 %v495, 0.0
      %v538 = vmax.f32 %v498, 0.0
      %v539 = vmax.f32 %v500, 0.0
      %v540 = vmax.f32 %v503, 0.0
      %v541 = vmax.f32 %v505, 0.0
      %v542 = vmax.f32 %v508, 0.0
      %v543 = vmax.f32 %v510, 0.0
      %v544 = vld [vmem:[%s4] sm:$0xff]
      %v545 = vld [vmem:[%s230] sm:$0xff]
      %v546 = vld [vmem:[%s230 + $0x8] sm:$0xff]
      %547 = vmatpush.msra.mxu0 %v527
      %548 = vmatpush.msra.mxu0 %v526
      %549 = vmatpush.msra.mxu0 %v525
      %550 = vmatpush.msra.mxu0 %v524
      %551 = vmatpush.msra.mxu0 %v523
      %552 = vmatpush.msra.mxu0 %v522
      %553 = vmatpush.msra.mxu0 %v521
      %554 = vmatpush.msra.mxu0 %v520
      %555 = vmatpush.msra.mxu0 %v519
      %556 = vmatpush.msra.mxu0 %v518
      %557 = vmatpush.msra.mxu0 %v517
      %558 = vmatpush.msra.mxu0 %v516
      %559 = vmatpush.msra.mxu0 %v515
      %560 = vmatpush.msra.mxu0 %v514
      %561 = vmatpush.msra.mxu0 %v513
      %562 = vmatpush.msra.mxu0 %v512
      %563 = vmatmul.f32.gmra.mxu0 %v545
      %v564 = vpop.f32.mrf.mxu0
      %v565 = vadd.f32 0.0, %v564
      %566 = vdwg.mxu0
      %567 = vmatpush.msra.mxu0 %v543
      %568 = vmatpush.msra.mxu0 %v542
      %569 = vmatpush.msra.mxu0 %v541
      %570 = vmatpush.msra.mxu0 %v540
      %571 = vmatpush.msra.mxu0 %v539
      %572 = vmatpush.msra.mxu0 %v538
      %573 = vmatpush.msra.mxu0 %v537
      %574 = vmatpush.msra.mxu0 %v536
      %575 = vmatpush.msra.mxu0 %v535
      %576 = vmatpush.msra.mxu0 %v534
      %577 = vmatpush.msra.mxu0 %v533
      %578 = vmatpush.msra.mxu0 %v532
      %579 = vmatpush.msra.mxu0 %v531
      %580 = vmatpush.msra.mxu0 %v530
      %581 = vmatpush.msra.mxu0 %v529
      %582 = vmatpush.msra.mxu0 %v528
      %583 = vmatmul.f32.gmra.mxu0 %v546
      %v584 = vpop.f32.mrf.mxu0
      %v585 = vadd.f32 %v565, %v584
      %586 = vdwg.mxu0
      %v587 = vadd.f32 %v544, %v585
      %588 = vst [vmem:[%s4] sm:$0xff] %v587
      %p589 = scmp.eq.s32.totalorder %s17, 1
      // Predicated region
      $region41: #{reid_forward.2} parent=35 // pred_check
        %p590 = pneg %p589
      $region42: #{reid_forward.2} parent=35 // pred_check_branch
        %592 = sbr.rel (%p590) target = $region44
      $region43: #{reid_forward.2} parent=35 // pred_region
        %v593 = vld [vmem:[%s3] sm:$0x1]
        %v594 = vld [vmem:[%s3 + $0x1] sm:$0x1]
        %v595 = vld [vmem:[%s4] sm:$0xff]
        %v596 = vperm.slane %v593, 0
        %v597 = vmul.f32 %v595, %v596
        %v598 = vperm.slane %v594, 0
        %v599 = vadd.f32 %v597, %v598
        %v600 = vpack.c.bf16 %v599, %v599
        %601 = vst [vmem:[%s5] sm:$0xf] %v600
      $region44: #{reid_forward.2} parent=35 // pred_fallthru
        _
      // Predicated region
      $region45: #{reid_forward.2} parent=35 // pred_check
        %p602 = pneg %p124
      $region46: #{reid_forward.2} parent=35 // pred_check_branch
        %604 = sbr.rel (%p602) target = $region48
      $region47: #{reid_forward.2} parent=35 // pred_region
        _
      $region48: #{reid_forward.2} parent=35 // pred_fallthru
        _
      // Predicated region
      $region49: #{reid_forward.2} parent=35 // pred_check
        %p605 = pneg %p145
      $region50: #{reid_forward.2} parent=35 // pred_check_branch
        %607 = sbr.rel (%p605) target = $region52
      $region51: #{reid_forward.2} parent=35 // pred_region
        _
      $region52: #{reid_forward.2} parent=35 // pred_fallthru
        _
      // Predicated region
      $region53: #{reid_forward.2} parent=35 // pred_check
        %p608 = pneg %p124
      $region54: #{reid_forward.2} parent=35 // pred_check_branch
        %610 = sbr.rel (%p608) target = $region56
      $region55: #{reid_forward.2} parent=35 // pred_region
        _
      $region56: #{reid_forward.2} parent=35 // pred_fallthru
        _
      // Predicated region
      $region57: #{reid_forward.2} parent=35 // pred_check
        %p611 = pneg %p145
      $region58: #{reid_forward.2} parent=35 // pred_check_branch
        %613 = sbr.rel (%p611) target = $region60
      $region59: #{reid_forward.2} parent=35 // pred_region
        _
      $region60: #{reid_forward.2} parent=35 // pred_fallthru
        _
    $region36: #{reid_forward.2} parent=5 // pred_fallthru
      _
    %p614 = scmp.le.s32.totalorder 2, %s12
    // Predicated region
    $region61: #{reid_forward.2} parent=5 // pred_check
      %p615 = pneg %p614
    $region62: #{reid_forward.2} parent=5 // pred_check_branch
      %617 = sbr.rel (%p615) target = $region64
    $region63: #{reid_forward.2} parent=5 // pred_region
      %s618 = ssub.s32 %s12, 2
    $region64: #{reid_forward.2} parent=5 // pred_fallthru
      _
  $region6: #{reid_forward.2} parent=0 // loop_footer
    %s16 = sadd.s32 1, %s12
  $region7: #{reid_forward.2} parent=0 // loop_footer_branch
    %11 = sbr.rel target = $region3
  $region8: #{reid_forward.2} parent=0 // loop_exit
    _

</llo_original>
